<compile_context>
chip_gen: v7x
topology: tpu7x:2x2x1
jax: 0.10.0
libtpu: 0.0.40
codegen_flags: <defaults>
</compile_context>

<pallas_src>
import functools
import math

import jax
import jax.numpy as jnp
from jax import lax
from jax.experimental import pallas as pl
from jax.experimental.pallas import tpu as pltpu


# ----------------------------------------------------------------------------
# Feature detection (done at BlockSpec-construction time only; never swallows
# runtime errors from an executed pallas_call).
# ----------------------------------------------------------------------------
def _buffered_supported():
    if not hasattr(pl, "Buffered"):
        return False
    try:
        pl.BlockSpec((8, 128), lambda i: (0, 0), pipeline_mode=pl.Buffered(1))
        return True
    except TypeError:
        return False


_BUFFERED_SUPPORTED = _buffered_supported()


def _weight_spec(shape, grid_ndim):
    """Constant-index weight BlockSpec; single-buffered when supported."""
    idx = (lambda bi: (0, 0)) if grid_ndim == 1 else (lambda bi, qi: (0, 0))
    if _BUFFERED_SUPPORTED:
        return pl.BlockSpec(shape, idx, pipeline_mode=pl.Buffered(1))
    return pl.BlockSpec(shape, idx)


def _head_group(heads, dim_head):
    """Largest head-group size whose lane width divides 128 (lane-dense stores)."""
    if dim_head >= 128 or (128 % dim_head) != 0:
        return 1
    return max(1, math.gcd(heads, 128 // dim_head))


# ----------------------------------------------------------------------------
# Shared attention body: q (TQ, INNER), k/v (N, INNER), all bf16.
# Writes concatenated head outputs (bf16) into out_acc (TQ, INNER).
# ----------------------------------------------------------------------------
def _attend_heads(q, k, v, out_acc, *, heads, dim_head):
    d = dim_head
    group = _head_group(heads, d)
    gw = group * d
    inner = heads * d
    for g0 in range(0, inner, gw):
        # 128-lane-aligned (when gw == 128) group slices; per-head sub-slices
        # stay in-register.
        q_g = q[:, g0:g0 + gw]
        k_g = k[:, g0:g0 + gw]
        v_g = v[:, g0:g0 + gw]
        outs = []
        for j in range(group):
            lo = j * d
            hi = lo + d
            q_h = q_g[:, lo:hi]                      # (TQ, D) bf16
            k_h = k_g[:, lo:hi]                      # (N,  D) bf16
            v_h = v_g[:, lo:hi]                      # (N,  D) bf16

            # q @ k^T contracting last dims (no materialized transpose).
            dots = lax.dot_general(
                q_h, k_h,
                dimension_numbers=(((1,), (1,)), ((), ())),
                preferred_element_type=jnp.float32)  # (TQ, N) f32

            # Numerically-stable softmax in f32; normalization applied AFTER
            # the A@V matmul (TQ*D multiplies instead of TQ*N).
            m = jnp.max(dots, axis=-1, keepdims=True)
            e = jnp.exp(dots - m)
            denom = jnp.sum(e, axis=-1, keepdims=True)
            out_h = jnp.dot(e.astype(jnp.bfloat16), v_h,
                            preferred_element_type=jnp.float32)   # (TQ, D) f32
            out_h = out_h * pl.reciprocal(denom, approx=True)
            outs.append(out_h.astype(jnp.bfloat16))
        slab = outs[0] if group == 1 else jnp.concatenate(outs, axis=-1)
        out_acc[:, g0:g0 + gw] = slab                # one lane-dense store / group


# ----------------------------------------------------------------------------
# Kernel A: full-sequence tile per batch row (grid = (B,)). K/V projected once
# per row; no duplicated x input.
# ----------------------------------------------------------------------------
def _attention_full_kernel(x_ref, wq_ref, wk_ref, wv_ref, wo_ref, o_ref,
                           out_acc, *, heads, dim_head):
    x = x_ref[...]                                                    # (N, DIM) bf16
    q = jnp.dot(x, wq_ref[...], preferred_element_type=jnp.float32).astype(jnp.bfloat16)
    k = jnp.dot(x, wk_ref[...], preferred_element_type=jnp.float32).astype(jnp.bfloat16)
    v = jnp.dot(x, wv_ref[...], preferred_element_type=jnp.float32).astype(jnp.bfloat16)

    _attend_heads(q, k, v, out_acc, heads=heads, dim_head=dim_head)

    y = jnp.dot(out_acc[...], wo_ref[...], preferred_element_type=jnp.float32)
    o_ref[...] = y.astype(o_ref.dtype)


# ----------------------------------------------------------------------------
# Kernel B: q-tiled with persistent K/V VMEM scratch. Grid = (B, N//TQ),
# semantics ("parallel", "arbitrary"); K/V projected only at q-tile 0 of each
# batch row (the full-sequence x block is only re-DMA'd when the batch index
# changes, since its index map is constant along the q axis).
# ----------------------------------------------------------------------------
def _attention_tiled_kernel(xq_ref, xkv_ref, wq_ref, wk_ref, wv_ref, wo_ref,
                            o_ref, out_acc, k_scr, v_scr, *, heads, dim_head):
    @pl.when(pl.program_id(1) == 0)
    def _():
        x_kv = xkv_ref[...]                                           # (N, DIM) bf16
        k_scr[...] = jnp.dot(x_kv, wk_ref[...],
                             preferred_element_type=jnp.float32).astype(jnp.bfloat16)
        v_scr[...] = jnp.dot(x_kv, wv_ref[...],
                             preferred_element_type=jnp.float32).astype(jnp.bfloat16)

    q = jnp.dot(xq_ref[...], wq_ref[...],
                preferred_element_type=jnp.float32).astype(jnp.bfloat16)

    _attend_heads(q, k_scr[...], v_scr[...], out_acc,
                  heads=heads, dim_head=dim_head)

    y = jnp.dot(out_acc[...], wo_ref[...], preferred_element_type=jnp.float32)
    o_ref[...] = y.astype(o_ref.dtype)


# ----------------------------------------------------------------------------
# Cost / VMEM helpers
# ----------------------------------------------------------------------------
def _cost_estimate(b, n, dim, inner, heads, out_itemsize):
    flops = (2 * b * n * dim * 3 * inner        # QKV projections
             + 4 * b * n * n * inner            # QK^T + A@V over all heads
             + 2 * b * n * inner * dim)         # output projection
    transcendentals = b * heads * n * n         # exp
    bytes_accessed = (b * n * dim * 2           # x (bf16)
                      + 4 * dim * inner * 2     # weights (bf16)
                      + b * n * dim * out_itemsize)
    return pl.CostEstimate(flops=int(flops),
                           transcendentals=int(transcendentals),
                           bytes_accessed=int(bytes_accessed))


def _vmem_limit_bytes(n_kv, tq, dim, inner, out_itemsize, weight_bufs):
    bf2 = 2
    weights = (3 * dim * inner + inner * dim) * bf2 * weight_bufs
    x_tiles = 2 * tq * dim * bf2 + 2 * n_kv * dim * bf2     # double-buffered inputs
    out_tiles = 2 * tq * dim * out_itemsize
    scratch = tq * inner * bf2 + 2 * n_kv * inner * bf2
    temps = (tq + 2 * n_kv) * inner * 4 + 2 * tq * n_kv * 4
    est = weights + x_tiles + out_tiles + scratch + temps
    # Generous headroom; keep below the v7x 64 MiB/TC physical VMEM.
    return int(min(max(2 * est + (4 << 20), 16 << 20), 48 << 20))


# ----------------------------------------------------------------------------
# Wrapper
# ----------------------------------------------------------------------------
def attention_pallas(x, w_qkv, w_out, *, heads, dim_head,
                     q_tile=256, full_seq_threshold=1024):
    """x: (B, N, DIM) f32; w_qkv: (DIM, 3*INNER); w_out: (INNER, DIM)."""
    b, n, dim = x.shape
    inner = heads * dim_head
    scale = dim_head ** (-0.5)
    out_itemsize = jnp.dtype(x.dtype).itemsize

    # bf16 operands for the MXU; fold the softmax scale into the Q weights
    # (exact in bf16 for power-of-two dim_head).
    x_bf = x.astype(jnp.bfloat16)
    w_q = (w_qkv[:, :inner] * scale).astype(jnp.bfloat16)       # (DIM, INNER)
    w_k = w_qkv[:, inner:2 * inner].astype(jnp.bfloat16)        # (DIM, INNER)
    w_v = w_qkv[:, 2 * inner:].astype(jnp.bfloat16)             # (DIM, INNER)
    w_o = w_out.astype(jnp.bfloat16)                            # (INNER, DIM)
    # TODO(synk): fp8 (e4m3) weight storage with per-channel scales (v7x MXU)
    # is not implemented; weights stay bf16 on all generations.

    weight_bufs = 1 if _BUFFERED_SUPPORTED else 2
    cost = _cost_estimate(b, n, dim, inner, heads, out_itemsize)

    can_tile = (n % q_tile == 0) and (n // q_tile >= 2)
    use_tiled = can_tile and (n > full_seq_threshold)

    if not use_tiled:
        # Full-sequence tile per batch row: grid = (B,), K/V projected once/row.
        # TODO(synk): with per-device batch == 1 this leaves the second v7x
        # TensorCore idle; a KV-recompute q-parallel variant would be needed.
        tq = n
        kernel = functools.partial(_attention_full_kernel,
                                   heads=heads, dim_head=dim_head)
        return pl.pallas_call(
            kernel,
            out_shape=jax.ShapeDtypeStruct((b, n, dim), x.dtype),
            grid_spec=pltpu.PrefetchScalarGridSpec(
                num_scalar_prefetch=0,
                grid=(b,),
                in_specs=[
                    pl.BlockSpec((pl.Squeezed(), n, dim), lambda bi: (bi, 0, 0)),
                    _weight_spec((dim, inner), 1),    # w_q (scale folded)
                    _weight_spec((dim, inner), 1),    # w_k
                    _weight_spec((dim, inner), 1),    # w_v
                    _weight_spec((inner, dim), 1),    # w_out
                ],
                out_specs=pl.BlockSpec((pl.Squeezed(), n, dim),
                                       lambda bi: (bi, 0, 0)),
                scratch_shapes=[pltpu.VMEM((tq, inner), jnp.bfloat16)],
            ),
            compiler_params=pltpu.CompilerParams(
                dimension_semantics=("parallel",),
                vmem_limit_bytes=_vmem_limit_bytes(
                    n, tq, dim, inner, out_itemsize, weight_bufs),
            ),
            cost_estimate=cost,
        )(x_bf, w_q, w_k, w_v, w_o)

    # q-tiled path with persistent K/V scratch (long sequences).
    tq = q_tile
    kernel = functools.partial(_attention_tiled_kernel,
                               heads=heads, dim_head=dim_head)
    return pl.pallas_call(
        kernel,
        out_shape=jax.ShapeDtypeStruct((b, n, dim), x.dtype),
        grid_spec=pltpu.PrefetchScalarGridSpec(
            num_scalar_prefetch=0,
            grid=(b, n // tq),
            in_specs=[
                # q-tile view of x
                pl.BlockSpec((pl.Squeezed(), tq, dim),
                             lambda bi, qi: (bi, qi, 0)),
                # full-sequence view of x (re-DMA'd only when bi changes)
                pl.BlockSpec((pl.Squeezed(), n, dim),
                             lambda bi, qi: (bi, 0, 0)),
                _weight_spec((dim, inner), 2),    # w_q (scale folded)
                _weight_spec((dim, inner), 2),    # w_k
                _weight_spec((dim, inner), 2),    # w_v
                _weight_spec((inner, dim), 2),    # w_out
            ],
            out_specs=pl.BlockSpec((pl.Squeezed(), tq, dim),
                                   lambda bi, qi: (bi, qi, 0)),
            scratch_shapes=[
                pltpu.VMEM((tq, inner), jnp.bfloat16),   # out_acc
                pltpu.VMEM((n, inner), jnp.bfloat16),    # persistent K
                pltpu.VMEM((n, inner), jnp.bfloat16),    # persistent V
            ],
        ),
        compiler_params=pltpu.CompilerParams(
            # q axis carries the K/V scratch -> "arbitrary"; batch is parallel.
            dimension_semantics=("parallel", "arbitrary"),
            vmem_limit_bytes=_vmem_limit_bytes(
                n, tq, dim, inner, out_itemsize, weight_bufs),
        ),
        cost_estimate=cost,
    )(x_bf, x_bf, w_q, w_k, w_v, w_o)


# ----------------------------------------------------------------------------
# Pure-JAX f32 reference matching the PyTorch forward semantics.
# ----------------------------------------------------------------------------
def attention_reference(x, w_qkv, w_out, *, heads, dim_head):
    b, n, dim = x.shape
    inner = heads * dim_head
    scale = dim_head ** (-0.5)
    qkv = x @ w_qkv
    q, k, v = jnp.split(qkv, 3, axis=-1)

    def to_heads(t):  # 'b n (h d) -> b h n d'
        return t.reshape(b, n, heads, dim_head).transpose(0, 2, 1, 3)

    q, k, v = map(to_heads, (q, k, v))
    dots = jnp.einsum("bhid,bhjd->bhij", q, k) * scale
    attn = jax.nn.softmax(dots, axis=-1)
    out = jnp.einsum("bhij,bhjd->bhid", attn, v)
    out = out.transpose(0, 2, 1, 3).reshape(b, n, inner)
    return out @ w_out


def _check(y, y_ref, tag):
    rel_err = float(jnp.max(jnp.abs(y - y_ref)) / (jnp.max(jnp.abs(y_ref)) + 1e-8))
    assert rel_err < 5e-2, f"{tag}: mismatch vs reference: rel_err={rel_err}"


if __name__ == "__main__":
    # TODO(synk): dropout in to_out omitted (inference mode -> identity); the
    # heads==1 and dim_head==dim "Identity to_out" special case is not specialized.

    key = jax.random.PRNGKey(0)
    kx, kq, ko, kx2, kq2, ko2 = jax.random.split(key, 6)

    # --- Test 1: small shapes consistent with the module (full-sequence path).
    B, N, DIM = 2, 8, 32
    HEADS, DIM_HEAD = 4, 16
    INNER = HEADS * DIM_HEAD
    x = jax.random.normal(kx, (B, N, DIM), dtype=jnp.float32)
    w_qkv = jax.random.normal(kq, (DIM, 3 * INNER), dtype=jnp.float32) * (DIM ** -0.5)
    w_out = jax.random.normal(ko, (INNER, DIM), dtype=jnp.float32) * (INNER ** -0.5)

    y = jax.block_until_ready(
        attention_pallas(x, w_qkv, w_out, heads=HEADS, dim_head=DIM_HEAD))
    _check(y, attention_reference(x, w_qkv, w_out, heads=HEADS, dim_head=DIM_HEAD),
           "full-seq path")

    # --- Test 2: exercise the q-tiled persistent-KV path (still small shapes).
    B2, N2, DIM2 = 1, 256, 128
    HEADS2, DIM_HEAD2 = 2, 64
    INNER2 = HEADS2 * DIM_HEAD2
    x2 = jax.random.normal(kx2, (B2, N2, DIM2), dtype=jnp.float32)
    w_qkv2 = jax.random.normal(kq2, (DIM2, 3 * INNER2), dtype=jnp.float32) * (DIM2 ** -0.5)
    w_out2 = jax.random.normal(ko2, (INNER2, DIM2), dtype=jnp.float32) * (INNER2 ** -0.5)

    y2 = jax.block_until_ready(
        attention_pallas(x2, w_qkv2, w_out2, heads=HEADS2, dim_head=DIM_HEAD2,
                         q_tile=128, full_seq_threshold=0))
    _check(y2, attention_reference(x2, w_qkv2, w_out2,
                                   heads=HEADS2, dim_head=DIM_HEAD2),
           "q-tiled path")

    print("KERNEL_OK")
</pallas_src>

<mosaic_0001>
module attributes {stable_mosaic.version = 11 : i64} {
  func.func @_attention_full_kernel(%arg0: i32, %arg1: memref<1x8x32xbf16, #tpu.memory_space<vmem>>, %arg2: memref<32x64xbf16, #tpu.memory_space<vmem>>, %arg3: memref<32x64xbf16, #tpu.memory_space<vmem>>, %arg4: memref<32x64xbf16, #tpu.memory_space<vmem>>, %arg5: memref<64x32xbf16, #tpu.memory_space<vmem>>, %arg6: memref<1x8x32xf32, #tpu.memory_space<vmem>>, %arg7: memref<8x64xbf16, #tpu.memory_space<vmem>>) attributes {dimension_semantics = [#tpu.dimension_semantics<parallel>], iteration_bounds = array<i64: 2>, scalar_prefetch = 0 : i64, scratch_operands = 1 : i64, tpu.core_type = #tpu.core_type<tc>, window_params = [{transform_indices = @transform_0, window_bounds = array<i64: 1, 8, 32>}, {pipeline_mode = #tpu.pipeline_mode<synchronous>, transform_indices = @transform_1, window_bounds = array<i64: 32, 64>}, {pipeline_mode = #tpu.pipeline_mode<synchronous>, transform_indices = @transform_2, window_bounds = array<i64: 32, 64>}, {pipeline_mode = #tpu.pipeline_mode<synchronous>, transform_indices = @transform_3, window_bounds = array<i64: 32, 64>}, {pipeline_mode = #tpu.pipeline_mode<synchronous>, transform_indices = @transform_4, window_bounds = array<i64: 64, 32>}, {transform_indices = @transform_5, window_bounds = array<i64: 1, 8, 32>}]} {
    %c0 = arith.constant 0 : index
    %c0_0 = arith.constant 0 : index
    %c0_1 = arith.constant 0 : index
    %0 = vector.load %arg1[%c0, %c0_0, %c0_1] : memref<1x8x32xbf16, #tpu.memory_space<vmem>>, vector<1x8x32xbf16>
    %1 = vector.shape_cast %0 : vector<1x8x32xbf16> to vector<8x32xbf16>
    %c0_2 = arith.constant 0 : index
    %c0_3 = arith.constant 0 : index
    %2 = vector.load %arg2[%c0_2, %c0_3] : memref<32x64xbf16, #tpu.memory_space<vmem>>, vector<32x64xbf16>
    %cst = arith.constant dense<0.000000e+00> : vector<8x64xf32>
    %3 = tpu.matmul %1, %2, %cst {dimension_numbers = #tpu.dot_dimension_numbers<[1], [0], [0], [1], [0, 0, 1, 1], [], []>} : vector<8x32xbf16>, vector<32x64xbf16>, vector<8x64xf32> -> vector<8x64xf32>
    %4 = arith.truncf %3 : vector<8x64xf32> to vector<8x64xbf16>
    %c0_4 = arith.constant 0 : index
    %c0_5 = arith.constant 0 : index
    %5 = vector.load %arg3[%c0_4, %c0_5] : memref<32x64xbf16, #tpu.memory_space<vmem>>, vector<32x64xbf16>
    %cst_6 = arith.constant dense<0.000000e+00> : vector<8x64xf32>
    %6 = tpu.matmul %1, %5, %cst_6 {dimension_numbers = #tpu.dot_dimension_numbers<[1], [0], [0], [1], [0, 0, 1, 1], [], []>} : vector<8x32xbf16>, vector<32x64xbf16>, vector<8x64xf32> -> vector<8x64xf32>
    %7 = arith.truncf %6 : vector<8x64xf32> to vector<8x64xbf16>
    %c0_7 = arith.constant 0 : index
    %c0_8 = arith.constant 0 : index
    %8 = vector.load %arg4[%c0_7, %c0_8] : memref<32x64xbf16, #tpu.memory_space<vmem>>, vector<32x64xbf16>
    %cst_9 = arith.constant dense<0.000000e+00> : vector<8x64xf32>
    %9 = tpu.matmul %1, %8, %cst_9 {dimension_numbers = #tpu.dot_dimension_numbers<[1], [0], [0], [1], [0, 0, 1, 1], [], []>} : vector<8x32xbf16>, vector<32x64xbf16>, vector<8x64xf32> -> vector<8x64xf32>
    %10 = arith.truncf %9 : vector<8x64xf32> to vector<8x64xbf16>
    %11 = vector.extract_strided_slice %4 {offsets = [0, 0], sizes = [8, 16], strides = [1, 1]} : vector<8x64xbf16> to vector<8x16xbf16>
    %12 = vector.extract_strided_slice %7 {offsets = [0, 0], sizes = [8, 16], strides = [1, 1]} : vector<8x64xbf16> to vector<8x16xbf16>
    %13 = vector.extract_strided_slice %10 {offsets = [0, 0], sizes = [8, 16], strides = [1, 1]} : vector<8x64xbf16> to vector<8x16xbf16>
    %cst_10 = arith.constant dense<0.000000e+00> : vector<8x8xf32>
    %14 = tpu.matmul %11, %12, %cst_10 {dimension_numbers = #tpu.dot_dimension_numbers<[1], [1], [0], [0], [0, 0, 1, 0], [], []>} : vector<8x16xbf16>, vector<8x16xbf16>, vector<8x8xf32> -> vector<8x8xf32>
    %cst_11 = arith.constant dense<0xFF800000> : vector<8xf32>
    %15 = vector.multi_reduction <maximumf>, %14, %cst_11 [1] : vector<8x8xf32> to vector<8xf32>
    %16 = vector.shape_cast %15 : vector<8xf32> to vector<8x1xf32>
    %17 = vector.broadcast %16 : vector<8x1xf32> to vector<8x8xf32>
    %18 = arith.subf %14, %17 : vector<8x8xf32>
    %19 = math.exp %18 : vector<8x8xf32>
    %cst_12 = arith.constant dense<0.000000e+00> : vector<8xf32>
    %20 = vector.multi_reduction <add>, %19, %cst_12 [1] : vector<8x8xf32> to vector<8xf32>
    %21 = vector.shape_cast %20 : vector<8xf32> to vector<8x1xf32>
    %22 = arith.truncf %19 : vector<8x8xf32> to vector<8x8xbf16>
    %cst_13 = arith.constant dense<0.000000e+00> : vector<8x16xf32>
    %23 = tpu.matmul %22, %13, %cst_13 {dimension_numbers = #tpu.dot_dimension_numbers<[1], [0], [0], [1], [0, 0, 1, 1], [], []>} : vector<8x8xbf16>, vector<8x16xbf16>, vector<8x16xf32> -> vector<8x16xf32>
    %24 = tpu.reciprocal %21 {approx = true} : vector<8x1xf32> -> vector<8x1xf32>
    %25 = vector.broadcast %24 : vector<8x1xf32> to vector<8x16xf32>
    %26 = arith.mulf %23, %25 : vector<8x16xf32>
    %27 = arith.truncf %26 : vector<8x16xf32> to vector<8x16xbf16>
    %28 = vector.extract_strided_slice %4 {offsets = [0, 16], sizes = [8, 16], strides = [1, 1]} : vector<8x64xbf16> to vector<8x16xbf16>
    %29 = vector.extract_strided_slice %7 {offsets = [0, 16], sizes = [8, 16], strides = [1, 1]} : vector<8x64xbf16> to vector<8x16xbf16>
    %30 = vector.extract_strided_slice %10 {offsets = [0, 16], sizes = [8, 16], strides = [1, 1]} : vector<8x64xbf16> to vector<8x16xbf16>
    %cst_14 = arith.constant dense<0.000000e+00> : vector<8x8xf32>
    %31 = tpu.matmul %28, %29, %cst_14 {dimension_numbers = #tpu.dot_dimension_numbers<[1], [1], [0], [0], [0, 0, 1, 0], [], []>} : vector<8x16xbf16>, vector<8x16xbf16>, vector<8x8xf32> -> vector<8x8xf32>
    %cst_15 = arith.constant dense<0xFF800000> : vector<8xf32>
    %32 = vector.multi_reduction <maximumf>, %31, %cst_15 [1] : vector<8x8xf32> to vector<8xf32>
    %33 = vector.shape_cast %32 : vector<8xf32> to vector<8x1xf32>
    %34 = vector.broadcast %33 : vector<8x1xf32> to vector<8x8xf32>
    %35 = arith.subf %31, %34 : vector<8x8xf32>
    %36 = math.exp %35 : vector<8x8xf32>
    %cst_16 = arith.constant dense<0.000000e+00> : vector<8xf32>
    %37 = vector.multi_reduction <add>, %36, %cst_16 [1] : vector<8x8xf32> to vector<8xf32>
    %38 = vector.shape_cast %37 : vector<8xf32> to vector<8x1xf32>
    %39 = arith.truncf %36 : vector<8x8xf32> to vector<8x8xbf16>
    %cst_17 = arith.constant dense<0.000000e+00> : vector<8x16xf32>
    %40 = tpu.matmul %39, %30, %cst_17 {dimension_numbers = #tpu.dot_dimension_numbers<[1], [0], [0], [1], [0, 0, 1, 1], [], []>} : vector<8x8xbf16>, vector<8x16xbf16>, vector<8x16xf32> -> vector<8x16xf32>
    %41 = tpu.reciprocal %38 {approx = true} : vector<8x1xf32> -> vector<8x1xf32>
    %42 = vector.broadcast %41 : vector<8x1xf32> to vector<8x16xf32>
    %43 = arith.mulf %40, %42 : vector<8x16xf32>
    %44 = arith.truncf %43 : vector<8x16xf32> to vector<8x16xbf16>
    %45 = vector.extract_strided_slice %4 {offsets = [0, 32], sizes = [8, 16], strides = [1, 1]} : vector<8x64xbf16> to vector<8x16xbf16>
    %46 = vector.extract_strided_slice %7 {offsets = [0, 32], sizes = [8, 16], strides = [1, 1]} : vector<8x64xbf16> to vector<8x16xbf16>
    %47 = vector.extract_strided_slice %10 {offsets = [0, 32], sizes = [8, 16], strides = [1, 1]} : vector<8x64xbf16> to vector<8x16xbf16>
    %cst_18 = arith.constant dense<0.000000e+00> : vector<8x8xf32>
    %48 = tpu.matmul %45, %46, %cst_18 {dimension_numbers = #tpu.dot_dimension_numbers<[1], [1], [0], [0], [0, 0, 1, 0], [], []>} : vector<8x16xbf16>, vector<8x16xbf16>, vector<8x8xf32> -> vector<8x8xf32>
    %cst_19 = arith.constant dense<0xFF800000> : vector<8xf32>
    %49 = vector.multi_reduction <maximumf>, %48, %cst_19 [1] : vector<8x8xf32> to vector<8xf32>
    %50 = vector.shape_cast %49 : vector<8xf32> to vector<8x1xf32>
    %51 = vector.broadcast %50 : vector<8x1xf32> to vector<8x8xf32>
    %52 = arith.subf %48, %51 : vector<8x8xf32>
    %53 = math.exp %52 : vector<8x8xf32>
    %cst_20 = arith.constant dense<0.000000e+00> : vector<8xf32>
    %54 = vector.multi_reduction <add>, %53, %cst_20 [1] : vector<8x8xf32> to vector<8xf32>
    %55 = vector.shape_cast %54 : vector<8xf32> to vector<8x1xf32>
    %56 = arith.truncf %53 : vector<8x8xf32> to vector<8x8xbf16>
    %cst_21 = arith.constant dense<0.000000e+00> : vector<8x16xf32>
    %57 = tpu.matmul %56, %47, %cst_21 {dimension_numbers = #tpu.dot_dimension_numbers<[1], [0], [0], [1], [0, 0, 1, 1], [], []>} : vector<8x8xbf16>, vector<8x16xbf16>, vector<8x16xf32> -> vector<8x16xf32>
    %58 = tpu.reciprocal %55 {approx = true} : vector<8x1xf32> -> vector<8x1xf32>
    %59 = vector.broadcast %58 : vector<8x1xf32> to vector<8x16xf32>
    %60 = arith.mulf %57, %59 : vector<8x16xf32>
    %61 = arith.truncf %60 : vector<8x16xf32> to vector<8x16xbf16>
    %62 = vector.extract_strided_slice %4 {offsets = [0, 48], sizes = [8, 16], strides = [1, 1]} : vector<8x64xbf16> to vector<8x16xbf16>
    %63 = vector.extract_strided_slice %7 {offsets = [0, 48], sizes = [8, 16], strides = [1, 1]} : vector<8x64xbf16> to vector<8x16xbf16>
    %64 = vector.extract_strided_slice %10 {offsets = [0, 48], sizes = [8, 16], strides = [1, 1]} : vector<8x64xbf16> to vector<8x16xbf16>
    %cst_22 = arith.constant dense<0.000000e+00> : vector<8x8xf32>
    %65 = tpu.matmul %62, %63, %cst_22 {dimension_numbers = #tpu.dot_dimension_numbers<[1], [1], [0], [0], [0, 0, 1, 0], [], []>} : vector<8x16xbf16>, vector<8x16xbf16>, vector<8x8xf32> -> vector<8x8xf32>
    %cst_23 = arith.constant dense<0xFF800000> : vector<8xf32>
    %66 = vector.multi_reduction <maximumf>, %65, %cst_23 [1] : vector<8x8xf32> to vector<8xf32>
    %67 = vector.shape_cast %66 : vector<8xf32> to vector<8x1xf32>
    %68 = vector.broadcast %67 : vector<8x1xf32> to vector<8x8xf32>
    %69 = arith.subf %65, %68 : vector<8x8xf32>
    %70 = math.exp %69 : vector<8x8xf32>
    %cst_24 = arith.constant dense<0.000000e+00> : vector<8xf32>
    %71 = vector.multi_reduction <add>, %70, %cst_24 [1] : vector<8x8xf32> to vector<8xf32>
    %72 = vector.shape_cast %71 : vector<8xf32> to vector<8x1xf32>
    %73 = arith.truncf %70 : vector<8x8xf32> to vector<8x8xbf16>
    %cst_25 = arith.constant dense<0.000000e+00> : vector<8x16xf32>
    %74 = tpu.matmul %73, %64, %cst_25 {dimension_numbers = #tpu.dot_dimension_numbers<[1], [0], [0], [1], [0, 0, 1, 1], [], []>} : vector<8x8xbf16>, vector<8x16xbf16>, vector<8x16xf32> -> vector<8x16xf32>
    %75 = tpu.reciprocal %72 {approx = true} : vector<8x1xf32> -> vector<8x1xf32>
    %76 = vector.broadcast %75 : vector<8x1xf32> to vector<8x16xf32>
    %77 = arith.mulf %74, %76 : vector<8x16xf32>
    %78 = arith.truncf %77 : vector<8x16xf32> to vector<8x16xbf16>
    %79 = tpu.concatenate %27, %44, %61, %78 in 1 : vector<8x16xbf16>, vector<8x16xbf16>, vector<8x16xbf16>, vector<8x16xbf16> -> vector<8x64xbf16>
    %c0_26 = arith.constant 0 : index
    %c0_27 = arith.constant 0 : index
    %80 = vector.load %arg7[%c0_26, %c0_27] : memref<8x64xbf16, #tpu.memory_space<vmem>>, vector<8x64xbf16>
    tpu.vector_store %arg7[%c0_26, %c0_27], %79 {strides = array<i32>} : memref<8x64xbf16, #tpu.memory_space<vmem>>, vector<8x64xbf16>,
    %c0_28 = arith.constant 0 : index
    %c0_29 = arith.constant 0 : index
    %81 = vector.load %arg7[%c0_28, %c0_29] : memref<8x64xbf16, #tpu.memory_space<vmem>>, vector<8x64xbf16>
    %c0_30 = arith.constant 0 : index
    %c0_31 = arith.constant 0 : index
    %82 = vector.load %arg5[%c0_30, %c0_31] : memref<64x32xbf16, #tpu.memory_space<vmem>>, vector<64x32xbf16>
    %cst_32 = arith.constant dense<0.000000e+00> : vector<8x32xf32>
    %83 = tpu.matmul %81, %82, %cst_32 {dimension_numbers = #tpu.dot_dimension_numbers<[1], [0], [0], [1], [0, 0, 1, 1], [], []>} : vector<8x64xbf16>, vector<64x32xbf16>, vector<8x32xf32> -> vector<8x32xf32>
    %c0_33 = arith.constant 0 : index
    %c0_34 = arith.constant 0 : index
    %c0_35 = arith.constant 0 : index
    %84 = vector.load %arg6[%c0_33, %c0_34, %c0_35] : memref<1x8x32xf32, #tpu.memory_space<vmem>>, vector<1x8x32xf32>
    %85 = vector.shape_cast %84 : vector<1x8x32xf32> to vector<8x32xf32>
    %86 = vector.shape_cast %83 : vector<8x32xf32> to vector<1x8x32xf32>
    tpu.vector_store %arg6[%c0_33, %c0_34, %c0_35], %86 {strides = array<i32>} : memref<1x8x32xf32, #tpu.memory_space<vmem>>, vector<1x8x32xf32>,
    return
  }
  func.func @transform_0(%arg0: i32) -> (i32, i32, i32) {
    %c0_i32 = arith.constant 0 : i32
    %c0_i32_0 = arith.constant 0 : i32
    %c0_i32_1 = arith.constant 0 : i32
    return %arg0, %c0_i32, %c0_i32_0 : i32, i32, i32
  }
  func.func @transform_1(%arg0: i32) -> (i32, i32) {
    %c0_i32 = arith.constant 0 : i32
    %c0_i32_0 = arith.constant 0 : i32
    %c0_i32_1 = arith.constant 0 : i32
    return %c0_i32, %c0_i32_0 : i32, i32
  }
  func.func @transform_2(%arg0: i32) -> (i32, i32) {
    %c0_i32 = arith.constant 0 : i32
    %c0_i32_0 = arith.constant 0 : i32
    %c0_i32_1 = arith.constant 0 : i32
    return %c0_i32, %c0_i32_0 : i32, i32
  }
  func.func @transform_3(%arg0: i32) -> (i32, i32) {
    %c0_i32 = arith.constant 0 : i32
    %c0_i32_0 = arith.constant 0 : i32
    %c0_i32_1 = arith.constant 0 : i32
    return %c0_i32, %c0_i32_0 : i32, i32
  }
  func.func @transform_4(%arg0: i32) -> (i32, i32) {
    %c0_i32 = arith.constant 0 : i32
    %c0_i32_0 = arith.constant 0 : i32
    %c0_i32_1 = arith.constant 0 : i32
    return %c0_i32, %c0_i32_0 : i32, i32
  }
  func.func @transform_5(%arg0: i32) -> (i32, i32, i32) {
    %c0_i32 = arith.constant 0 : i32
    %c0_i32_0 = arith.constant 0 : i32
    %c0_i32_1 = arith.constant 0 : i32
    return %arg0, %c0_i32, %c0_i32_0 : i32, i32, i32
  }
}

</mosaic_0001>

<llo_original>
// kernel: tpu_custom_call.1
$region0: #{tpu_custom_call.1}
  #allocation0 [shape = 'u32[]', space=smem, size = 0x4, offset = 0x4, fixed_abs, tag = 'smem constant byte address 0x4 - core index']
  #allocation1 [shape = 'u32[144,128]{1,0:T(1,128)}', space=vmem, size = 0x12000, scoped, tag = 'internal scratch']
  #allocation2 [shape = 'bf16[8,64]{1,0:T(8,128)(2,1)}', space=vmem, size = 0x800, scoped, tag = 'scratch operand']
  %s0 = inlined_call_operand.hbm [shape: bf16[2,8,32], index: 0, kind: input, shape index: {}]
  %s1 = inlined_call_operand.vmem [shape: bf16[32,64], index: 1, kind: input, shape index: {}]
  %s2 = inlined_call_operand.vmem [shape: bf16[32,64], index: 2, kind: input, shape index: {}]
  %s3 = inlined_call_operand.vmem [shape: bf16[32,64], index: 3, kind: input, shape index: {}]
  %s4 = inlined_call_operand.vmem [shape: bf16[64,32], index: 4, kind: input, shape index: {}]
  %s5 = inlined_call_operand.hbm [shape: f32[2,8,32], index: 5, kind: output, shape index: {}]
  %s6 = sld [smem:[#allocation0]]
  $region57: #{tpu_custom_call.1} parent=0
    _
  %s8 = ssub.s32 1, %s6
  %s9 = scalar_select 0, %s8, %s6
  $region1: #{tpu_custom_call.1} parent=0
    #allocation3 [shape = 'u8[4096]{0}', space=vmem, size = 0x1000, scoped, tag = 'input window, operand 0']
    #allocation4 [shape = 's32[2]{0}', space=sflag, size = 0x8, scoped, tag = 'scoped memory for tpu_custom_call.1']
    #allocation5 [shape = 's32[2]{0}', space=sflag, size = 0x8, scoped, tag = 'scoped memory for tpu_custom_call.1']
    #allocation6 [shape = 'u8[8192]{0}', space=vmem, size = 0x2000, scoped, tag = 'output window, operand 0']
    %10 = vsyncpa [#allocation4], 0
    %s11 = scalar_lea.sflag [#allocation4], 1
    %12 = vsyncpa %s11, 0
    %13 = vsyncpa [#allocation5], 0
    %s14 = scalar_lea.sflag [#allocation5], 1
    %15 = vsyncpa %s14, 0
    loop: start=0, step=1, limit=4
    $region2: #{tpu_custom_call.1} parent=1 // loop_pre_header
      _
    $region3: #{tpu_custom_call.1} parent=1 // loop_header
      %s17 = sphi 0, %s21
      %p18 = scmp.ge.s32.totalorder %s17, 4
      %s27 = sphi 0, %s29
      %s30 = sphi 0, %s27
      %s31 = sphi 0, %s30
      %s47 = sphi 0, %s31
      %s51 = sphi 0, %s51
      %s53 = sphi 0, %s51
      %s54 = sphi 0, %s53
      %s68 = sphi 0, %s54
      %s72 = sphi 0, %s72
      %s74 = sphi 0, %s72
      %s75 = sphi 0, %s74
      %s89 = sphi 0, %s75
      %s93 = sphi 0, %s93
      %s95 = sphi 0, %s93
      %s96 = sphi 0, %s95
      %s110 = sphi 0, %s96
      %s114 = sphi 0, %s114
      %s116 = sphi 0, %s114
      %s117 = sphi 0, %s116
      %s131 = sphi 0, %s117
      %s137 = sphi 0, %s139
      %s140 = sphi 0, %s137
      %s141 = sphi 0, %s140
      %s157 = sphi 0, %s141
    $region4: #{tpu_custom_call.1} parent=1 // loop_header_branch
      %20 = sbr.rel (%p18) target = $region8
    $region5: #{tpu_custom_call.1} parent=1 // loop_body
      %s22 = ssub.s32 %s17, 1
      %s23 = ssub.s32 %s17, 2
      %s24 = sadd.s32 %s17, 1
      %s25 = ssub.s32 %s17, %s24
      %p26 = scmp.eq.s32.totalorder %s25, 0
      %s28 = sadd.s32 %s27, 1
      %s29 = scalar_select %p26, %s27, %s28
      %p32 = pneg %p26
      %p33 = scmp.eq.s32.totalorder %s17, 1
      %p34 = por %p32, %p33
      %p35 = scmp.ne.s32.totalorder %s27, %s30
      %p36 = scmp.eq.s32.totalorder %s17, 0
      %p37 = por %p35, %p36
      %p38 = scmp.ne.s32.totalorder %s27, %s30
      %p39 = scmp.eq.s32.totalorder %s22, 1
      %p40 = por %p38, %p39
      %p41 = scmp.ne.s32.totalorder %s30, %s31
      %p42 = scmp.eq.s32.totalorder %s22, 0
      %p43 = por %p41, %p42
      %p44 = scmp.ne.s32.totalorder %s30, %s31
      %p45 = scmp.eq.s32.totalorder %s23, 1
      %p46 = por %p44, %p45
      %p48 = scmp.ne.s32.totalorder %s31, %s47
      %p49 = scmp.eq.s32.totalorder %s23, 0
      %p50 = por %p48, %p49
      %s52 = sadd.s32 %s51, 1
      %p55 = scmp.eq.s32.totalorder %s17, 1
      %p56 = scmp.ne.s32.totalorder %s51, %s53
      %p57 = scmp.eq.s32.totalorder %s17, 0
      %p58 = por %p56, %p57
      %p59 = scmp.ne.s32.totalorder %s51, %s53
      %p60 = scmp.eq.s32.totalorder %s22, 1
      %p61 = por %p59, %p60
      %p62 = scmp.ne.s32.totalorder %s53, %s54
      %p63 = scmp.eq.s32.totalorder %s22, 0
      %p64 = por %p62, %p63
      %p65 = scmp.ne.s32.totalorder %s53, %s54
      %p66 = scmp.eq.s32.totalorder %s23, 1
      %p67 = por %p65, %p66
      %p69 = scmp.ne.s32.totalorder %s54, %s68
      %p70 = scmp.eq.s32.totalorder %s23, 0
      %p71 = por %p69, %p70
      %s73 = sadd.s32 %s72, 1
      %p76 = scmp.eq.s32.totalorder %s17, 1
      %p77 = scmp.ne.s32.totalorder %s72, %s74
      %p78 = scmp.eq.s32.totalorder %s17, 0
      %p79 = por %p77, %p78
      %p80 = scmp.ne.s32.totalorder %s72, %s74
      %p81 = scmp.eq.s32.totalorder %s22, 1
      %p82 = por %p80, %p81
      %p83 = scmp.ne.s32.totalorder %s74, %s75
      %p84 = scmp.eq.s32.totalorder %s22, 0
      %p85 = por %p83, %p84
      %p86 = scmp.ne.s32.totalorder %s74, %s75
      %p87 = scmp.eq.s32.totalorder %s23, 1
      %p88 = por %p86, %p87
      %p90 = scmp.ne.s32.totalorder %s75, %s89
      %p91 = scmp.eq.s32.totalorder %s23, 0
      %p92 = por %p90, %p91
      %s94 = sadd.s32 %s93, 1
      %p97 = scmp.eq.s32.totalorder %s17, 1
      %p98 = scmp.ne.s32.totalorder %s93, %s95
      %p99 = scmp.eq.s32.totalorder %s17, 0
      %p100 = por %p98, %p99
      %p101 = scmp.ne.s32.totalorder %s93, %s95
      %p102 = scmp.eq.s32.totalorder %s22, 1
      %p103 = por %p101, %p102
      %p104 = scmp.ne.s32.totalorder %s95, %s96
      %p105 = scmp.eq.s32.totalorder %s22, 0
      %p106 = por %p104, %p105
      %p107 = scmp.ne.s32.totalorder %s95, %s96
      %p108 = scmp.eq.s32.totalorder %s23, 1
      %p109 = por %p107, %p108
      %p111 = scmp.ne.s32.totalorder %s96, %s110
      %p112 = scmp.eq.s32.totalorder %s23, 0
      %p113 = por %p111, %p112
      %s115 = sadd.s32 %s114, 1
      %p118 = scmp.eq.s32.totalorder %s17, 1
      %p119 = scmp.ne.s32.totalorder %s114, %s116
      %p120 = scmp.eq.s32.totalorder %s17, 0
      %p121 = por %p119, %p120
      %p122 = scmp.ne.s32.totalorder %s114, %s116
      %p123 = scmp.eq.s32.totalorder %s22, 1
      %p124 = por %p122, %p123
      %p125 = scmp.ne.s32.totalorder %s116, %s117
      %p126 = scmp.eq.s32.totalorder %s22, 0
      %p127 = por %p125, %p126
      %p128 = scmp.ne.s32.totalorder %s116, %s117
      %p129 = scmp.eq.s32.totalorder %s23, 1
      %p130 = por %p128, %p129
      %p132 = scmp.ne.s32.totalorder %s117, %s131
      %p133 = scmp.eq.s32.totalorder %s23, 0
      %p134 = por %p132, %p133
      %s135 = ssub.s32 %s17, %s24
      %p136 = scmp.eq.s32.totalorder %s135, 0
      %s138 = sadd.s32 %s137, 1
      %s139 = scalar_select %p136, %s137, %s138
      %p142 = pneg %p136
      %p143 = scmp.eq.s32.totalorder %s17, 1
      %p144 = por %p142, %p143
      %p145 = scmp.ne.s32.totalorder %s137, %s140
      %p146 = scmp.eq.s32.totalorder %s17, 0
      %p147 = por %p145, %p146
      %p148 = scmp.ne.s32.totalorder %s137, %s140
      %p149 = scmp.eq.s32.totalorder %s22, 1
      %p150 = por %p148, %p149
      %p151 = scmp.ne.s32.totalorder %s140, %s141
      %p152 = scmp.eq.s32.totalorder %s22, 0
      %p153 = por %p151, %p152
      %p154 = scmp.ne.s32.totalorder %s140, %s141
      %p155 = scmp.eq.s32.totalorder %s23, 1
      %p156 = por %p154, %p155
      %p158 = scmp.ne.s32.totalorder %s141, %s157
      %p159 = scmp.eq.s32.totalorder %s23, 0
      %p160 = por %p158, %p159
      %p161 = scmp.le.s32.totalorder 1, %s17
      %p162 = scmp.lt.s32.totalorder %s17, 3
      %p163 = pnand %p161, %p162
      %p164 = pneg %p163
      // Predicated region
      $region9: #{tpu_custom_call.1} parent=5 // pred_check
        _
      $region10: #{tpu_custom_call.1} parent=5 // pred_check_branch
        %166 = sbr.rel (%p163) target = $region12
      $region11: #{tpu_custom_call.1} parent=5 // pred_region
        %s167 = ssub.s32 %s17, 1
        // Predicated region
        $region13: #{tpu_custom_call.1} parent=11 // pred_check
          %p168 = pneg %p64
        $region14: #{tpu_custom_call.1} parent=11 // pred_check_branch
          %170 = sbr.rel (%p168) target = $region16
        $region15: #{tpu_custom_call.1} parent=11 // pred_region
          _
        $region16: #{tpu_custom_call.1} parent=11 // pred_fallthru
          _
        // Predicated region
        $region17: #{tpu_custom_call.1} parent=11 // pred_check
          %p171 = pneg %p85
        $region18: #{tpu_custom_call.1} parent=11 // pred_check_branch
          %173 = sbr.rel (%p171) target = $region20
        $region19: #{tpu_custom_call.1} parent=11 // pred_region
          _
        $region20: #{tpu_custom_call.1} parent=11 // pred_fallthru
          _
        // Predicated region
        $region21: #{tpu_custom_call.1} parent=11 // pred_check
          %p174 = pneg %p106
        $region22: #{tpu_custom_call.1} parent=11 // pred_check_branch
          %176 = sbr.rel (%p174) target = $region24
        $region23: #{tpu_custom_call.1} parent=11 // pred_region
          _
        $region24: #{tpu_custom_call.1} parent=11 // pred_fallthru
          _
        // Predicated region
        $region25: #{tpu_custom_call.1} parent=11 // pred_check
          %p177 = pneg %p127
        $region26: #{tpu_custom_call.1} parent=11 // pred_check_branch
          %179 = sbr.rel (%p177) target = $region28
        $region27: #{tpu_custom_call.1} parent=11 // pred_region
          _
        $region28: #{tpu_custom_call.1} parent=11 // pred_fallthru
          _
      $region12: #{tpu_custom_call.1} parent=5 // pred_fallthru
        _
      %p180 = scmp.lt.s32.totalorder %s17, 2
      // Predicated region
      $region29: #{tpu_custom_call.1} parent=5 // pred_check
        %p181 = pneg %p180
      $region30: #{tpu_custom_call.1} parent=5 // pred_check_branch
        %183 = sbr.rel (%p181) target = $region32
      $region31: #{tpu_custom_call.1} parent=5 // pred_region
        // Predicated region
        $region33: #{tpu_custom_call.1} parent=31 // pred_check
          %p184 = pneg %p37
        $region34: #{tpu_custom_call.1} parent=31 // pred_check_branch
          %186 = sbr.rel (%p184) target = $region36
        $region35: #{tpu_custom_call.1} parent=31 // pred_region
          %s187 = sand.u32 %s27, 1
          %s188 = scalar_lea.sflag [#allocation4], %s187
          %s189 = sand.u32 %s27, 1
          %s190 = smul.addr %s189, 4
          %s191 = scalar_lea.vmem [#allocation3], %s190
          %s193 = ssub.s32 64, 64
          %194 = vsyncadd %s188, %s193
          %s195 = smul.addr %s17, 64
          %s196 = scalar_lea.hbm %s0, %s195
          %s198 = sshll.u32 %s191, 4
          %s199 = int_to_ptr.vmem [resolvable:$true] %s198
          %201 = dma.hbm_to_vmem [thread:$0]  %s196, 64, %s199, %s188
        $region36: #{tpu_custom_call.1} parent=31 // pred_fallthru
          _
      $region32: #{tpu_custom_call.1} parent=5 // pred_fallthru
        _
      %p202 = scmp.le.s32.totalorder 1, %s17
      %p203 = scmp.lt.s32.totalorder %s17, 3
      %p204 = pnand %p202, %p203
      %p205 = pneg %p204
      // Predicated region
      $region37: #{tpu_custom_call.1} parent=5 // pred_check
        _
      $region38: #{tpu_custom_call.1} parent=5 // pred_check_branch
        %207 = sbr.rel (%p204) target = $region40
      $region39: #{tpu_custom_call.1} parent=5 // pred_region
        %s208 = ssub.s32 %s17, 1
        %s209 = sand.u32 %s30, 1
        %s210 = scalar_lea.sflag [#allocation4], %s209
        %s211 = sand.u32 %s30, 1
        %s212 = smul.addr %s211, 4
        %s213 = scalar_lea.vmem [#allocation3], %s212
        // Predicated region
        $region41: #{tpu_custom_call.1} parent=39 // pred_check
          %p214 = pneg %p43
        $region42: #{tpu_custom_call.1} parent=39 // pred_check_branch
          %216 = sbr.rel (%p214) target = $region44
        $region43: #{tpu_custom_call.1} parent=39 // pred_region
          %217 = dma.done %s210, 64
        $region44: #{tpu_custom_call.1} parent=39 // pred_fallthru
          _
        %s218 = sand.u32 %s30, 1
        %s219 = scalar_lea.sflag [#allocation4], %s218
        %s220 = sand.u32 %s30, 1
        %s221 = smul.addr %s220, 4
        %s222 = scalar_lea.vmem [#allocation3], %s221
        %p223 = pneg %p43
        %p224 = pneg %p40
        %p225 = pneg %p64
        %p226 = pneg %p61
        %p227 = pneg %p85
        %p228 = pneg %p82
        %p229 = pneg %p106
        %p230 = pneg %p103
        %p231 = pneg %p127
        %p232 = pneg %p124
        %p233 = pneg %p153
        %p234 = pneg %p150
        %s235 = sand.u32 %s140, 1
        %s236 = scalar_lea.sflag [#allocation5], %s235
        %s237 = sand.u32 %s140, 1
        %s238 = smul.addr %s237, 8
        %s239 = scalar_lea.vmem [#allocation6], %s238
        %v241 = vld [vmem:[%s213] sm:$0xf]
        %v242 = vld [vmem:[%s1] sm:$0xf]
        %v243 = vld [vmem:[%s1 + $0x4] sm:$0xf]
        %v244 = vld [vmem:[%s1 + $0x8] sm:$0xf]
        %v245 = vld [vmem:[%s1 + $0xc] sm:$0xf]
        %v250 = vunpack.c.l.b16 %v242
        %v251 = vunpack.c.l.b16 %v243
        %v252 = vunpack.c.l.b16 %v244
        %v253 = vunpack.c.l.b16 %v245
        %v254 = vpack.c.b16 %v251, %v250
        %v255 = vpack.c.b16 %v253, %v252
        %vm258 = vcmask 261120
        %v260 = vsel %vm258, %v241, 0
        %262 = vmatprep.subr.bf16.mxu0 0
        %263 = vmatpush1.bf16.msra.mxu0 %v254
        %264 = vmatprep.subr.bf16.mxu0 0
        %265 = vmatpush1.bf16.msra.mxu0 %v255
        %266 = vmatprep.subr.bf16.mxu0 0
        %267 = vmatpush1.bf16.msra.mxu0 0
        %268 = vmatprep.subr.bf16.mxu0 0
        %269 = vmatpush1.bf16.msra.mxu0 0
        %270 = vmatprep.subr.bf16.mxu0 0
        %271 = vmatpush1.bf16.msra.mxu0 0
        %272 = vmatprep.subr.bf16.mxu0 0
        %273 = vmatpush1.bf16.msra.mxu0 0
        %274 = vmatprep.subr.bf16.mxu0 0
        %275 = vmatpush1.bf16.msra.mxu0 0
        %276 = vmatprep.subr.bf16.mxu0 0
        %277 = vmatpush1.bf16.msra.mxu0 0
        %278 = vmatprep.subr.bf16.mxu0 0
        %279 = vmatpush1.bf16.msra.mxu0 0
        %280 = vmatprep.subr.bf16.mxu0 0
        %281 = vmatpush1.bf16.msra.mxu0 0
        %282 = vmatprep.subr.bf16.mxu0 0
        %283 = vmatpush1.bf16.msra.mxu0 0
        %284 = vmatprep.subr.bf16.mxu0 0
        %285 = vmatpush1.bf16.msra.mxu0 0
        %286 = vmatprep.subr.bf16.mxu0 0
        %287 = vmatpush1.bf16.msra.mxu0 0
        %288 = vmatprep.subr.bf16.mxu0 0
        %289 = vmatpush1.bf16.msra.mxu0 0
        %290 = vmatprep.subr.bf16.mxu0 0
        %291 = vmatpush1.bf16.msra.mxu0 0
        %292 = vmatprep.subr.bf16.mxu0 0
        %293 = vmatpush1.bf16.msra.mxu0 0
        %294 = vmatprep.mubr.bf16.mxu0 0
        %295 = vmatmul.mubr.bf16.gmra.mrb[0].mxu0 %v260
        %v296 = vpop.f32.mrb[0].mxu0
        %v297 = vadd.f32 0.0, %v296
        %v298 = vpop.f32.mrb[0].mxu0
        %v299 = vpop.f32.mrb[0].mxu0
        %v300 = vpop.f32.mrb[0].mxu0
        %301 = vdwg.mxu0
        %v302 = vpack.c.bf16 %v297, %v297
        %v303 = vld [vmem:[%s2] sm:$0xf]
        %v304 = vld [vmem:[%s2 + $0x4] sm:$0xf]
        %v305 = vld [vmem:[%s2 + $0x8] sm:$0xf]
        %v306 = vld [vmem:[%s2 + $0xc] sm:$0xf]
        %v311 = vunpack.c.l.b16 %v303
        %v312 = vunpack.c.l.b16 %v304
        %v313 = vunpack.c.l.b16 %v305
        %v314 = vunpack.c.l.b16 %v306
        %v315 = vpack.c.b16 %v312, %v311
        %v316 = vpack.c.b16 %v314, %v313
        %319 = vmatprep.subr.bf16.mxu0 0
        %320 = vmatpush1.bf16.msra.mxu0 %v315
        %321 = vmatprep.subr.bf16.mxu0 0
        %322 = vmatpush1.bf16.msra.mxu0 %v316
        %323 = vmatprep.subr.bf16.mxu0 0
        %324 = vmatpush1.bf16.msra.mxu0 0
        %325 = vmatprep.subr.bf16.mxu0 0
        %326 = vmatpush1.bf16.msra.mxu0 0
        %327 = vmatprep.subr.bf16.mxu0 0
        %328 = vmatpush1.bf16.msra.mxu0 0
        %329 = vmatprep.subr.bf16.mxu0 0
        %330 = vmatpush1.bf16.msra.mxu0 0
        %331 = vmatprep.subr.bf16.mxu0 0
        %332 = vmatpush1.bf16.msra.mxu0 0
        %333 = vmatprep.subr.bf16.mxu0 0
        %334 = vmatpush1.bf16.msra.mxu0 0
        %335 = vmatprep.subr.bf16.mxu0 0
        %336 = vmatpush1.bf16.msra.mxu0 0
        %337 = vmatprep.subr.bf16.mxu0 0
        %338 = vmatpush1.bf16.msra.mxu0 0
        %339 = vmatprep.subr.bf16.mxu0 0
        %340 = vmatpush1.bf16.msra.mxu0 0
        %341 = vmatprep.subr.bf16.mxu0 0
        %342 = vmatpush1.bf16.msra.mxu0 0
        %343 = vmatprep.subr.bf16.mxu0 0
        %344 = vmatpush1.bf16.msra.mxu0 0
        %345 = vmatprep.subr.bf16.mxu0 0
        %346 = vmatpush1.bf16.msra.mxu0 0
        %347 = vmatprep.subr.bf16.mxu0 0
        %348 = vmatpush1.bf16.msra.mxu0 0
        %349 = vmatprep.subr.bf16.mxu0 0
        %350 = vmatpush1.bf16.msra.mxu0 0
        %351 = vmatprep.mubr.bf16.mxu0 0
        %352 = vmatmul.mubr.bf16.gmra.mrb[0].mxu0 %v260
        %v353 = vpop.f32.mrb[0].mxu0
        %v354 = vadd.f32 0.0, %v353
        %v355 = vpop.f32.mrb[0].mxu0
        %v356 = vpop.f32.mrb[0].mxu0
        %v357 = vpop.f32.mrb[0].mxu0
        %358 = vdwg.mxu0
        %v359 = vpack.c.bf16 %v354, %v354
        %v360 = vld [vmem:[%s3] sm:$0xf]
        %v361 = vld [vmem:[%s3 + $0x4] sm:$0xf]
        %v362 = vld [vmem:[%s3 + $0x8] sm:$0xf]
        %v363 = vld [vmem:[%s3 + $0xc] sm:$0xf]
        %v368 = vunpack.c.l.b16 %v360
        %v369 = vunpack.c.l.b16 %v361
        %v370 = vunpack.c.l.b16 %v362
        %v371 = vunpack.c.l.b16 %v363
        %v372 = vpack.c.b16 %v369, %v368
        %v373 = vpack.c.b16 %v371, %v370
        %376 = vmatprep.subr.bf16.mxu0 0
        %377 = vmatpush1.bf16.msra.mxu0 %v372
        %378 = vmatprep.subr.bf16.mxu0 0
        %379 = vmatpush1.bf16.msra.mxu0 %v373
        %380 = vmatprep.subr.bf16.mxu0 0
        %381 = vmatpush1.bf16.msra.mxu0 0
        %382 = vmatprep.subr.bf16.mxu0 0
        %383 = vmatpush1.bf16.msra.mxu0 0
        %384 = vmatprep.subr.bf16.mxu0 0
        %385 = vmatpush1.bf16.msra.mxu0 0
        %386 = vmatprep.subr.bf16.mxu0 0
        %387 = vmatpush1.bf16.msra.mxu0 0
        %388 = vmatprep.subr.bf16.mxu0 0
        %389 = vmatpush1.bf16.msra.mxu0 0
        %390 = vmatprep.subr.bf16.mxu0 0
        %391 = vmatpush1.bf16.msra.mxu0 0
        %392 = vmatprep.subr.bf16.mxu0 0
        %393 = vmatpush1.bf16.msra.mxu0 0
        %394 = vmatprep.subr.bf16.mxu0 0
        %395 = vmatpush1.bf16.msra.mxu0 0
        %396 = vmatprep.subr.bf16.mxu0 0
        %397 = vmatpush1.bf16.msra.mxu0 0
        %398 = vmatprep.subr.bf16.mxu0 0
        %399 = vmatpush1.bf16.msra.mxu0 0
        %400 = vmatprep.subr.bf16.mxu0 0
        %401 = vmatpush1.bf16.msra.mxu0 0
        %402 = vmatprep.subr.bf16.mxu0 0
        %403 = vmatpush1.bf16.msra.mxu0 0
        %404 = vmatprep.subr.bf16.mxu0 0
        %405 = vmatpush1.bf16.msra.mxu0 0
        %406 = vmatprep.subr.bf16.mxu0 0
        %407 = vmatpush1.bf16.msra.mxu0 0
        %408 = vmatprep.mubr.bf16.mxu0 0
        %409 = vmatmul.mubr.bf16.gmra.mrb[0].mxu0 %v260
        %v410 = vpop.f32.mrb[0].mxu0
        %v411 = vadd.f32 0.0, %v410
        %v412 = vpop.f32.mrb[0].mxu0
        %v413 = vpop.f32.mrb[0].mxu0
        %v414 = vpop.f32.mrb[0].mxu0
        %415 = vdwg.mxu0
        %v416 = vpack.c.bf16 %v411, %v411
        %vm417 = vcmask 130048
        %v419 = vsel %vm417, %v302, 0
        %v422 = vsel %vm417, %v359, 0
        %424 = vmatprep.subr.bf16.mxu0 0
        %425 = vmatpush1.bf16.xpose.msra.mxu0 %v422
        %426 = vmatprep.subr.bf16.mxu0 0
        %427 = vmatpush1.bf16.xpose.msra.mxu0 0
        %428 = vmatprep.subr.bf16.mxu0 0
        %429 = vmatpush1.bf16.xpose.msra.mxu0 0
        %430 = vmatprep.subr.bf16.mxu0 0
        %431 = vmatpush1.bf16.xpose.msra.mxu0 0
        %432 = vmatprep.subr.bf16.mxu0 0
        %433 = vmatpush1.bf16.xpose.msra.mxu0 0
        %434 = vmatprep.subr.bf16.mxu0 0
        %435 = vmatpush1.bf16.xpose.msra.mxu0 0
        %436 = vmatprep.subr.bf16.mxu0 0
        %437 = vmatpush1.bf16.xpose.msra.mxu0 0
        %438 = vmatprep.subr.bf16.mxu0 0
        %439 = vmatpush1.bf16.xpose.msra.mxu0 0
        %440 = vmatprep.subr.bf16.mxu0 0
        %441 = vmatpush1.bf16.xpose.msra.mxu0 0
        %442 = vmatprep.subr.bf16.mxu0 0
        %443 = vmatpush1.bf16.xpose.msra.mxu0 0
        %444 = vmatprep.subr.bf16.mxu0 0
        %445 = vmatpush1.bf16.xpose.msra.mxu0 0
        %446 = vmatprep.subr.bf16.mxu0 0
        %447 = vmatpush1.bf16.xpose.msra.mxu0 0
        %448 = vmatprep.subr.bf16.mxu0 0
        %449 = vmatpush1.bf16.xpose.msra.mxu0 0
        %450 = vmatprep.subr.bf16.mxu0 0
        %451 = vmatpush1.bf16.xpose.msra.mxu0 0
        %452 = vmatprep.subr.bf16.mxu0 0
        %453 = vmatpush1.bf16.xpose.msra.mxu0 0
        %454 = vmatprep.subr.bf16.mxu0 0
        %455 = vmatpush1.bf16.xpose.msra.mxu0 0
        %456 = vmatprep.mubr.bf16.mxu0 0
        %457 = vmatmul.mubr.bf16.gmra.mrb[0].mxu0 %v419
        %v458 = vpop.f32.mrb[0].mxu0
        %v459 = vadd.f32 0.0, %v458
        %v460 = vpop.f32.mrb[0].mxu0
        %v461 = vpop.f32.mrb[0].mxu0
        %v462 = vpop.f32.mrb[0].mxu0
        %463 = vdwg.mxu0
        %vm464 = vcmask 64512
        %v465 = vsel %vm464, %v459, -inf
        %466 = vmax.xlane.f32.xlu0 %v465
        %v467 = vpop.xlane.xlu0 %466
        %v468 = vsub.f32 %v459, %v467
        %v469 = vmul.f32 %v468, 1.442695
        %v470 = vpow.pop %v469
        %v471 = vsel %vm464, %v470, 0.0
        %472 = vadd.xlane.f32.xlu0 %v471
        %v473 = vpop.xlane.xlu0 %472
        %v474 = vpack.c.bf16 %v470, %v470
        %v476 = vsel %vm464, %v474, 0
        %vm478 = vcmask 1043456
        %v480 = vsel %vm478, %v416, 0
        %482 = vmatprep.subr.bf16.mxu0 0
        %483 = vmatpush1.bf16.msra.mxu0 %v480
        %484 = vmatprep.subr.bf16.mxu0 0
        %485 = vmatpush1.bf16.msra.mxu0 0
        %486 = vmatprep.subr.bf16.mxu0 0
        %487 = vmatpush1.bf16.msra.mxu0 0
        %488 = vmatprep.subr.bf16.mxu0 0
        %489 = vmatpush1.bf16.msra.mxu0 0
        %490 = vmatprep.subr.bf16.mxu0 0
        %491 = vmatpush1.bf16.msra.mxu0 0
        %492 = vmatprep.subr.bf16.mxu0 0
        %493 = vmatpush1.bf16.msra.mxu0 0
        %494 = vmatprep.subr.bf16.mxu0 0
        %495 = vmatpush1.bf16.msra.mxu0 0
        %496 = vmatprep.subr.bf16.mxu0 0
        %497 = vmatpush1.bf16.msra.mxu0 0
        %498 = vmatprep.subr.bf16.mxu0 0
        %499 = vmatpush1.bf16.msra.mxu0 0
        %500 = vmatprep.subr.bf16.mxu0 0
        %501 = vmatpush1.bf16.msra.mxu0 0
        %502 = vmatprep.subr.bf16.mxu0 0
        %503 = vmatpush1.bf16.msra.mxu0 0
        %504 = vmatprep.subr.bf16.mxu0 0
        %505 = vmatpush1.bf16.msra.mxu0 0
        %506 = vmatprep.subr.bf16.mxu0 0
        %507 = vmatpush1.bf16.msra.mxu0 0
        %508 = vmatprep.subr.bf16.mxu0 0
        %509 = vmatpush1.bf16.msra.mxu0 0
        %510 = vmatprep.subr.bf16.mxu0 0
        %511 = vmatpush1.bf16.msra.mxu0 0
        %512 = vmatprep.subr.bf16.mxu0 0
        %513 = vmatpush1.bf16.msra.mxu0 0
        %514 = vmatprep.mubr.bf16.mxu0 0
        %515 = vmatmul.mubr.bf16.gmra.mrb[0].mxu0 %v476
        %v516 = vpop.f32.mrb[0].mxu0
        %v517 = vadd.f32 0.0, %v516
        %v518 = vpop.f32.mrb[0].mxu0
        %v519 = vpop.f32.mrb[0].mxu0
        %v520 = vpop.f32.mrb[0].mxu0
        %521 = vdwg.mxu0
        %v522 = vrcp.pop %v473
        %v523 = vmul.f32 %v517, %v522
        %v524 = vpack.c.bf16 %v523, %v523
        %526 = vrot.lane.b32.xlu0 %v302, 112
        %v527 = vpop.permute.xlu0 %526
        %529 = vrot.lane.b32.xlu0 %v359, 112
        %v530 = vpop.permute.xlu0 %529
        %v532 = vsel %vm417, %v527, 0
        %v535 = vsel %vm417, %v530, 0
        %537 = vmatprep.subr.bf16.mxu0 0
        %538 = vmatpush1.bf16.xpose.msra.mxu0 %v535
        %539 = vmatprep.subr.bf16.mxu0 0
        %540 = vmatpush1.bf16.xpose.msra.mxu0 0
        %541 = vmatprep.subr.bf16.mxu0 0
        %542 = vmatpush1.bf16.xpose.msra.mxu0 0
        %543 = vmatprep.subr.bf16.mxu0 0
        %544 = vmatpush1.bf16.xpose.msra.mxu0 0
        %545 = vmatprep.subr.bf16.mxu0 0
        %546 = vmatpush1.bf16.xpose.msra.mxu0 0
        %547 = vmatprep.subr.bf16.mxu0 0
        %548 = vmatpush1.bf16.xpose.msra.mxu0 0
        %549 = vmatprep.subr.bf16.mxu0 0
        %550 = vmatpush1.bf16.xpose.msra.mxu0 0
        %551 = vmatprep.subr.bf16.mxu0 0
        %552 = vmatpush1.bf16.xpose.msra.mxu0 0
        %553 = vmatprep.subr.bf16.mxu0 0
        %554 = vmatpush1.bf16.xpose.msra.mxu0 0
        %555 = vmatprep.subr.bf16.mxu0 0
        %556 = vmatpush1.bf16.xpose.msra.mxu0 0
        %557 = vmatprep.subr.bf16.mxu0 0
        %558 = vmatpush1.bf16.xpose.msra.mxu0 0
        %559 = vmatprep.subr.bf16.mxu0 0
        %560 = vmatpush1.bf16.xpose.msra.mxu0 0
        %561 = vmatprep.subr.bf16.mxu0 0
        %562 = vmatpush1.bf16.xpose.msra.mxu0 0
        %563 = vmatprep.subr.bf16.mxu0 0
        %564 = vmatpush1.bf16.xpose.msra.mxu0 0
        %565 = vmatprep.subr.bf16.mxu0 0
        %566 = vmatpush1.bf16.xpose.msra.mxu0 0
        %567 = vmatprep.subr.bf16.mxu0 0
        %568 = vmatpush1.bf16.xpose.msra.mxu0 0
        %569 = vmatprep.mubr.bf16.mxu0 0
        %570 = vmatmul.mubr.bf16.gmra.mrb[0].mxu0 %v532
        %v571 = vpop.f32.mrb[0].mxu0
        %v572 = vadd.f32 0.0, %v571
        %v573 = vpop.f32.mrb[0].mxu0
        %v574 = vpop.f32.mrb[0].mxu0
        %v575 = vpop.f32.mrb[0].mxu0
        %576 = vdwg.mxu0
        %v577 = vsel %vm464, %v572, -inf
        %578 = vmax.xlane.f32.xlu0 %v577
        %v579 = vpop.xlane.xlu0 %578
        %v580 = vsub.f32 %v572, %v579
        %v581 = vmul.f32 %v580, 1.442695
        %v582 = vpow.pop %v581
        %v583 = vsel %vm464, %v582, 0.0
        %584 = vadd.xlane.f32.xlu0 %v583
        %v585 = vpop.xlane.xlu0 %584
        %v586 = vpack.c.bf16 %v582, %v582
        %588 = vrot.lane.b32.xlu0 %v416, 112
        %v589 = vpop.permute.xlu0 %588
        %v591 = vsel %vm464, %v586, 0
        %v594 = vsel %vm478, %v589, 0
        %596 = vmatprep.subr.bf16.mxu0 0
        %597 = vmatpush1.bf16.msra.mxu0 %v594
        %598 = vmatprep.subr.bf16.mxu0 0
        %599 = vmatpush1.bf16.msra.mxu0 0
        %600 = vmatprep.subr.bf16.mxu0 0
        %601 = vmatpush1.bf16.msra.mxu0 0
        %602 = vmatprep.subr.bf16.mxu0 0
        %603 = vmatpush1.bf16.msra.mxu0 0
        %604 = vmatprep.subr.bf16.mxu0 0
        %605 = vmatpush1.bf16.msra.mxu0 0
        %606 = vmatprep.subr.bf16.mxu0 0
        %607 = vmatpush1.bf16.msra.mxu0 0
        %608 = vmatprep.subr.bf16.mxu0 0
        %609 = vmatpush1.bf16.msra.mxu0 0
        %610 = vmatprep.subr.bf16.mxu0 0
        %611 = vmatpush1.bf16.msra.mxu0 0
        %612 = vmatprep.subr.bf16.mxu0 0
        %613 = vmatpush1.bf16.msra.mxu0 0
        %614 = vmatprep.subr.bf16.mxu0 0
        %615 = vmatpush1.bf16.msra.mxu0 0
        %616 = vmatprep.subr.bf16.mxu0 0
        %617 = vmatpush1.bf16.msra.mxu0 0
        %618 = vmatprep.subr.bf16.mxu0 0
        %619 = vmatpush1.bf16.msra.mxu0 0
        %620 = vmatprep.subr.bf16.mxu0 0
        %621 = vmatpush1.bf16.msra.mxu0 0
        %622 = vmatprep.subr.bf16.mxu0 0
        %623 = vmatpush1.bf16.msra.mxu0 0
        %624 = vmatprep.subr.bf16.mxu0 0
        %625 = vmatpush1.bf16.msra.mxu0 0
        %626 = vmatprep.subr.bf16.mxu0 0
        %627 = vmatpush1.bf16.msra.mxu0 0
        %628 = vmatprep.mubr.bf16.mxu0 0
        %629 = vmatmul.mubr.bf16.gmra.mrb[0].mxu0 %v591
        %v630 = vpop.f32.mrb[0].mxu0
        %v631 = vadd.f32 0.0, %v630
        %v632 = vpop.f32.mrb[0].mxu0
        %v633 = vpop.f32.mrb[0].mxu0
        %v634 = vpop.f32.mrb[0].mxu0
        %635 = vdwg.mxu0
        %v636 = vrcp.pop %v585
        %v637 = vmul.f32 %v631, %v636
        %v638 = vpack.c.bf16 %v637, %v637
        %639 = vrot.lane.b32.xlu0 %v302, 96
        %v640 = vpop.permute.xlu0 %639
        %641 = vrot.lane.b32.xlu0 %v359, 96
        %v642 = vpop.permute.xlu0 %641
        %v644 = vsel %vm417, %v640, 0
        %v647 = vsel %vm417, %v642, 0
        %649 = vmatprep.subr.bf16.mxu0 0
        %650 = vmatpush1.bf16.xpose.msra.mxu0 %v647
        %651 = vmatprep.subr.bf16.mxu0 0
        %652 = vmatpush1.bf16.xpose.msra.mxu0 0
        %653 = vmatprep.subr.bf16.mxu0 0
        %654 = vmatpush1.bf16.xpose.msra.mxu0 0
        %655 = vmatprep.subr.bf16.mxu0 0
        %656 = vmatpush1.bf16.xpose.msra.mxu0 0
        %657 = vmatprep.subr.bf16.mxu0 0
        %658 = vmatpush1.bf16.xpose.msra.mxu0 0
        %659 = vmatprep.subr.bf16.mxu0 0
        %660 = vmatpush1.bf16.xpose.msra.mxu0 0
        %661 = vmatprep.subr.bf16.mxu0 0
        %662 = vmatpush1.bf16.xpose.msra.mxu0 0
        %663 = vmatprep.subr.bf16.mxu0 0
        %664 = vmatpush1.bf16.xpose.msra.mxu0 0
        %665 = vmatprep.subr.bf16.mxu0 0
        %666 = vmatpush1.bf16.xpose.msra.mxu0 0
        %667 = vmatprep.subr.bf16.mxu0 0
        %668 = vmatpush1.bf16.xpose.msra.mxu0 0
        %669 = vmatprep.subr.bf16.mxu0 0
        %670 = vmatpush1.bf16.xpose.msra.mxu0 0
        %671 = vmatprep.subr.bf16.mxu0 0
        %672 = vmatpush1.bf16.xpose.msra.mxu0 0
        %673 = vmatprep.subr.bf16.mxu0 0
        %674 = vmatpush1.bf16.xpose.msra.mxu0 0
        %675 = vmatprep.subr.bf16.mxu0 0
        %676 = vmatpush1.bf16.xpose.msra.mxu0 0
        %677 = vmatprep.subr.bf16.mxu0 0
        %678 = vmatpush1.bf16.xpose.msra.mxu0 0
        %679 = vmatprep.subr.bf16.mxu0 0
        %680 = vmatpush1.bf16.xpose.msra.mxu0 0
        %681 = vmatprep.mubr.bf16.mxu0 0
        %682 = vmatmul.mubr.bf16.gmra.mrb[0].mxu0 %v644
        %v683 = vpop.f32.mrb[0].mxu0
        %v684 = vadd.f32 0.0, %v683
        %v685 = vpop.f32.mrb[0].mxu0
        %v686 = vpop.f32.mrb[0].mxu0
        %v687 = vpop.f32.mrb[0].mxu0
        %688 = vdwg.mxu0
        %v689 = vsel %vm464, %v684, -inf
        %690 = vmax.xlane.f32.xlu0 %v689
        %v691 = vpop.xlane.xlu0 %690
        %v692 = vsub.f32 %v684, %v691
        %v693 = vmul.f32 %v692, 1.442695
        %v694 = vpow.pop %v693
        %v695 = vsel %vm464, %v694, 0.0
        %696 = vadd.xlane.f32.xlu0 %v695
        %v697 = vpop.xlane.xlu0 %696
        %v698 = vpack.c.bf16 %v694, %v694
        %699 = vrot.lane.b32.xlu0 %v416, 96
        %v700 = vpop.permute.xlu0 %699
        %v702 = vsel %vm464, %v698, 0
        %v705 = vsel %vm478, %v700, 0
        %707 = vmatprep.subr.bf16.mxu0 0
        %708 = vmatpush1.bf16.msra.mxu0 %v705
        %709 = vmatprep.subr.bf16.mxu0 0
        %710 = vmatpush1.bf16.msra.mxu0 0
        %711 = vmatprep.subr.bf16.mxu0 0
        %712 = vmatpush1.bf16.msra.mxu0 0
        %713 = vmatprep.subr.bf16.mxu0 0
        %714 = vmatpush1.bf16.msra.mxu0 0
        %715 = vmatprep.subr.bf16.mxu0 0
        %716 = vmatpush1.bf16.msra.mxu0 0
        %717 = vmatprep.subr.bf16.mxu0 0
        %718 = vmatpush1.bf16.msra.mxu0 0
        %719 = vmatprep.subr.bf16.mxu0 0
        %720 = vmatpush1.bf16.msra.mxu0 0
        %721 = vmatprep.subr.bf16.mxu0 0
        %722 = vmatpush1.bf16.msra.mxu0 0
        %723 = vmatprep.subr.bf16.mxu0 0
        %724 = vmatpush1.bf16.msra.mxu0 0
        %725 = vmatprep.subr.bf16.mxu0 0
        %726 = vmatpush1.bf16.msra.mxu0 0
        %727 = vmatprep.subr.bf16.mxu0 0
        %728 = vmatpush1.bf16.msra.mxu0 0
        %729 = vmatprep.subr.bf16.mxu0 0
        %730 = vmatpush1.bf16.msra.mxu0 0
        %731 = vmatprep.subr.bf16.mxu0 0
        %732 = vmatpush1.bf16.msra.mxu0 0
        %733 = vmatprep.subr.bf16.mxu0 0
        %734 = vmatpush1.bf16.msra.mxu0 0
        %735 = vmatprep.subr.bf16.mxu0 0
        %736 = vmatpush1.bf16.msra.mxu0 0
        %737 = vmatprep.subr.bf16.mxu0 0
        %738 = vmatpush1.bf16.msra.mxu0 0
        %739 = vmatprep.mubr.bf16.mxu0 0
        %740 = vmatmul.mubr.bf16.gmra.mrb[0].mxu0 %v702
        %v741 = vpop.f32.mrb[0].mxu0
        %v742 = vadd.f32 0.0, %v741
        %v743 = vpop.f32.mrb[0].mxu0
        %v744 = vpop.f32.mrb[0].mxu0
        %v745 = vpop.f32.mrb[0].mxu0
        %746 = vdwg.mxu0
        %v747 = vrcp.pop %v697
        %v748 = vmul.f32 %v742, %v747
        %v749 = vpack.c.bf16 %v748, %v748
        %750 = vrot.lane.b32.xlu0 %v302, 80
        %v751 = vpop.permute.xlu0 %750
        %752 = vrot.lane.b32.xlu0 %v359, 80
        %v753 = vpop.permute.xlu0 %752
        %v755 = vsel %vm417, %v751, 0
        %v758 = vsel %vm417, %v753, 0
        %760 = vmatprep.subr.bf16.mxu0 0
        %761 = vmatpush1.bf16.xpose.msra.mxu0 %v758
        %762 = vmatprep.subr.bf16.mxu0 0
        %763 = vmatpush1.bf16.xpose.msra.mxu0 0
        %764 = vmatprep.subr.bf16.mxu0 0
        %765 = vmatpush1.bf16.xpose.msra.mxu0 0
        %766 = vmatprep.subr.bf16.mxu0 0
        %767 = vmatpush1.bf16.xpose.msra.mxu0 0
        %768 = vmatprep.subr.bf16.mxu0 0
        %769 = vmatpush1.bf16.xpose.msra.mxu0 0
        %770 = vmatprep.subr.bf16.mxu0 0
        %771 = vmatpush1.bf16.xpose.msra.mxu0 0
        %772 = vmatprep.subr.bf16.mxu0 0
        %773 = vmatpush1.bf16.xpose.msra.mxu0 0
        %774 = vmatprep.subr.bf16.mxu0 0
        %775 = vmatpush1.bf16.xpose.msra.mxu0 0
        %776 = vmatprep.subr.bf16.mxu0 0
        %777 = vmatpush1.bf16.xpose.msra.mxu0 0
        %778 = vmatprep.subr.bf16.mxu0 0
        %779 = vmatpush1.bf16.xpose.msra.mxu0 0
        %780 = vmatprep.subr.bf16.mxu0 0
        %781 = vmatpush1.bf16.xpose.msra.mxu0 0
        %782 = vmatprep.subr.bf16.mxu0 0
        %783 = vmatpush1.bf16.xpose.msra.mxu0 0
        %784 = vmatprep.subr.bf16.mxu0 0
        %785 = vmatpush1.bf16.xpose.msra.mxu0 0
        %786 = vmatprep.subr.bf16.mxu0 0
        %787 = vmatpush1.bf16.xpose.msra.mxu0 0
        %788 = vmatprep.subr.bf16.mxu0 0
        %789 = vmatpush1.bf16.xpose.msra.mxu0 0
        %790 = vmatprep.subr.bf16.mxu0 0
        %791 = vmatpush1.bf16.xpose.msra.mxu0 0
        %792 = vmatprep.mubr.bf16.mxu0 0
        %793 = vmatmul.mubr.bf16.gmra.mrb[0].mxu0 %v755
        %v794 = vpop.f32.mrb[0].mxu0
        %v795 = vadd.f32 0.0, %v794
        %v796 = vpop.f32.mrb[0].mxu0
        %v797 = vpop.f32.mrb[0].mxu0
        %v798 = vpop.f32.mrb[0].mxu0
        %799 = vdwg.mxu0
        %v800 = vsel %vm464, %v795, -inf
        %801 = vmax.xlane.f32.xlu0 %v800
        %v802 = vpop.xlane.xlu0 %801
        %v803 = vsub.f32 %v795, %v802
        %v804 = vmul.f32 %v803, 1.442695
        %v805 = vpow.pop %v804
        %v806 = vsel %vm464, %v805, 0.0
        %807 = vadd.xlane.f32.xlu0 %v806
        %v808 = vpop.xlane.xlu0 %807
        %v809 = vpack.c.bf16 %v805, %v805
        %810 = vrot.lane.b32.xlu0 %v416, 80
        %v811 = vpop.permute.xlu0 %810
        %v813 = vsel %vm464, %v809, 0
        %v816 = vsel %vm478, %v811, 0
        %818 = vmatprep.subr.bf16.mxu0 0
        %819 = vmatpush1.bf16.msra.mxu0 %v816
        %820 = vmatprep.subr.bf16.mxu0 0
        %821 = vmatpush1.bf16.msra.mxu0 0
        %822 = vmatprep.subr.bf16.mxu0 0
        %823 = vmatpush1.bf16.msra.mxu0 0
        %824 = vmatprep.subr.bf16.mxu0 0
        %825 = vmatpush1.bf16.msra.mxu0 0
        %826 = vmatprep.subr.bf16.mxu0 0
        %827 = vmatpush1.bf16.msra.mxu0 0
        %828 = vmatprep.subr.bf16.mxu0 0
        %829 = vmatpush1.bf16.msra.mxu0 0
        %830 = vmatprep.subr.bf16.mxu0 0
        %831 = vmatpush1.bf16.msra.mxu0 0
        %832 = vmatprep.subr.bf16.mxu0 0
        %833 = vmatpush1.bf16.msra.mxu0 0
        %834 = vmatprep.subr.bf16.mxu0 0
        %835 = vmatpush1.bf16.msra.mxu0 0
        %836 = vmatprep.subr.bf16.mxu0 0
        %837 = vmatpush1.bf16.msra.mxu0 0
        %838 = vmatprep.subr.bf16.mxu0 0
        %839 = vmatpush1.bf16.msra.mxu0 0
        %840 = vmatprep.subr.bf16.mxu0 0
        %841 = vmatpush1.bf16.msra.mxu0 0
        %842 = vmatprep.subr.bf16.mxu0 0
        %843 = vmatpush1.bf16.msra.mxu0 0
        %844 = vmatprep.subr.bf16.mxu0 0
        %845 = vmatpush1.bf16.msra.mxu0 0
        %846 = vmatprep.subr.bf16.mxu0 0
        %847 = vmatpush1.bf16.msra.mxu0 0
        %848 = vmatprep.subr.bf16.mxu0 0
        %849 = vmatpush1.bf16.msra.mxu0 0
        %850 = vmatprep.mubr.bf16.mxu0 0
        %851 = vmatmul.mubr.bf16.gmra.mrb[0].mxu0 %v813
        %v852 = vpop.f32.mrb[0].mxu0
        %v853 = vadd.f32 0.0, %v852
        %v854 = vpop.f32.mrb[0].mxu0
        %v855 = vpop.f32.mrb[0].mxu0
        %v856 = vpop.f32.mrb[0].mxu0
        %857 = vdwg.mxu0
        %v858 = vrcp.pop %v808
        %v859 = vmul.f32 %v853, %v858
        %v860 = vpack.c.bf16 %v859, %v859
        %862 = vrot.lane.b32.xlu0 %v638, 16
        %v863 = vpop.permute.xlu0 %862
        %865 = vrot.lane.b32.xlu0 %v749, 32
        %v866 = vpop.permute.xlu0 %865
        %868 = vrot.lane.b32.xlu0 %v860, 48
        %v869 = vpop.permute.xlu0 %868
        %v872 = vsel %vm417, %v524, %v863
        %v874 = vsel %vm258, %v872, %v866
        %vm875 = vcmask 392192
        %v877 = vsel %vm875, %v874, %v869
        %vm879 = vcmask 519168
        %880 = vst.msk [vmem:[#allocation2] sm:$0xf] %vm879, %v877
        %v881 = vld [vmem:[#allocation2] sm:$0xf]
        %v882 = vld [vmem:[%s4] sm:$0xf]
        %v883 = vld [vmem:[%s4 + $0x4] sm:$0xf]
        %v884 = vld [vmem:[%s4 + $0x8] sm:$0xf]
        %v885 = vld [vmem:[%s4 + $0xc] sm:$0xf]
        %v886 = vld [vmem:[%s4 + $0x10] sm:$0xf]
        %v887 = vld [vmem:[%s4 + $0x14] sm:$0xf]
        %v888 = vld [vmem:[%s4 + $0x18] sm:$0xf]
        %v889 = vld [vmem:[%s4 + $0x1c] sm:$0xf]
        %v898 = vunpack.c.l.b16 %v882
        %v899 = vunpack.c.l.b16 %v883
        %v900 = vunpack.c.l.b16 %v884
        %v901 = vunpack.c.l.b16 %v885
        %v902 = vunpack.c.l.b16 %v886
        %v903 = vunpack.c.l.b16 %v887
        %v904 = vunpack.c.l.b16 %v888
        %v905 = vunpack.c.l.b16 %v889
        %v906 = vpack.c.b16 %v899, %v898
        %v907 = vpack.c.b16 %v901, %v900
        %v908 = vpack.c.b16 %v903, %v902
        %v909 = vpack.c.b16 %v905, %v904
        %vm914 = vcmask 523264
        %v916 = vsel %vm914, %v881, 0
        %918 = vmatprep.subr.bf16.mxu0 0
        %919 = vmatpush1.bf16.msra.mxu0 %v906
        %920 = vmatprep.subr.bf16.mxu0 0
        %921 = vmatpush1.bf16.msra.mxu0 %v907
        %922 = vmatprep.subr.bf16.mxu0 0
        %923 = vmatpush1.bf16.msra.mxu0 %v908
        %924 = vmatprep.subr.bf16.mxu0 0
        %925 = vmatpush1.bf16.msra.mxu0 %v909
        %926 = vmatprep.subr.bf16.mxu0 0
        %927 = vmatpush1.bf16.msra.mxu0 0
        %928 = vmatprep.subr.bf16.mxu0 0
        %929 = vmatpush1.bf16.msra.mxu0 0
        %930 = vmatprep.subr.bf16.mxu0 0
        %931 = vmatpush1.bf16.msra.mxu0 0
        %932 = vmatprep.subr.bf16.mxu0 0
        %933 = vmatpush1.bf16.msra.mxu0 0
        %934 = vmatprep.subr.bf16.mxu0 0
        %935 = vmatpush1.bf16.msra.mxu0 0
        %936 = vmatprep.subr.bf16.mxu0 0
        %937 = vmatpush1.bf16.msra.mxu0 0
        %938 = vmatprep.subr.bf16.mxu0 0
        %939 = vmatpush1.bf16.msra.mxu0 0
        %940 = vmatprep.subr.bf16.mxu0 0
        %941 = vmatpush1.bf16.msra.mxu0 0
        %942 = vmatprep.subr.bf16.mxu0 0
        %943 = vmatpush1.bf16.msra.mxu0 0
        %944 = vmatprep.subr.bf16.mxu0 0
        %945 = vmatpush1.bf16.msra.mxu0 0
        %946 = vmatprep.subr.bf16.mxu0 0
        %947 = vmatpush1.bf16.msra.mxu0 0
        %948 = vmatprep.subr.bf16.mxu0 0
        %949 = vmatpush1.bf16.msra.mxu0 0
        %950 = vmatprep.mubr.bf16.mxu0 0
        %951 = vmatmul.mubr.bf16.gmra.mrb[0].mxu0 %v916
        %v952 = vpop.f32.mrb[0].mxu0
        %v953 = vadd.f32 0.0, %v952
        %v954 = vpop.f32.mrb[0].mxu0
        %v955 = vpop.f32.mrb[0].mxu0
        %v956 = vpop.f32.mrb[0].mxu0
        %957 = vdwg.mxu0
        %958 = vst.msk [vmem:[%s239] sm:$0xff] %vm258, %v953
        %s959 = sand.u32 %s140, 1
        %s960 = scalar_lea.sflag [#allocation5], %s959
        %s961 = sand.u32 %s140, 1
        %s962 = smul.addr %s961, 8
        %s963 = scalar_lea.vmem [#allocation6], %s962
        // Predicated region
        $region45: #{tpu_custom_call.1} parent=39 // pred_check
          %p964 = pneg %p150
        $region46: #{tpu_custom_call.1} parent=39 // pred_check_branch
          %966 = sbr.rel (%p964) target = $region48
        $region47: #{tpu_custom_call.1} parent=39 // pred_region
          %s968 = ssub.s32 128, 128
          %969 = vsyncadd %s960, %s968
          %s970 = smul.addr %s22, 128
          %s971 = scalar_lea.hbm %s5, %s970
          %s973 = sshll.u32 %s963, 4
          %s974 = int_to_ptr.vmem [resolvable:$true] %s973
          %976 = dma.vmem_to_hbm [thread:$0]  %s974, 128, %s971, %s960
        $region48: #{tpu_custom_call.1} parent=39 // pred_fallthru
          _
      $region40: #{tpu_custom_call.1} parent=5 // pred_fallthru
        _
      %p977 = scmp.le.s32.totalorder 2, %s17
      // Predicated region
      $region49: #{tpu_custom_call.1} parent=5 // pred_check
        %p978 = pneg %p977
      $region50: #{tpu_custom_call.1} parent=5 // pred_check_branch
        %980 = sbr.rel (%p978) target = $region52
      $region51: #{tpu_custom_call.1} parent=5 // pred_region
        %s981 = ssub.s32 %s17, 2
        // Predicated region
        $region53: #{tpu_custom_call.1} parent=51 // pred_check
          %p982 = pneg %p156
        $region54: #{tpu_custom_call.1} parent=51 // pred_check_branch
          %984 = sbr.rel (%p982) target = $region56
        $region55: #{tpu_custom_call.1} parent=51 // pred_region
          %s985 = sand.u32 %s141, 1
          %s986 = scalar_lea.sflag [#allocation5], %s985
          %s987 = sand.u32 %s141, 1
          %s988 = smul.addr %s987, 8
          %s989 = scalar_lea.vmem [#allocation6], %s988
          %990 = dma.done %s986, 128
        $region56: #{tpu_custom_call.1} parent=51 // pred_fallthru
          _
      $region52: #{tpu_custom_call.1} parent=5 // pred_fallthru
        _
    $region6: #{tpu_custom_call.1} parent=1 // loop_footer
      %s21 = sadd.s32 1, %s17
    $region7: #{tpu_custom_call.1} parent=1 // loop_footer_branch
      %16 = sbr.rel target = $region3
    $region8: #{tpu_custom_call.1} parent=1 // loop_exit
      _
    %991 = vsyncpa [#allocation4], 1
    %s992 = scalar_lea.sflag [#allocation4], 1
    %993 = vsyncpa %s992, 1
    %994 = vsyncpa [#allocation5], 1
    %s995 = scalar_lea.sflag [#allocation5], 1
    %996 = vsyncpa %s995, 1

</llo_original>
